<compile_context>
chip_gen: v5e
topology: v5e:2x2
jax: 0.10.0
libtpu: 0.0.40
codegen_flags: <defaults>
</compile_context>

<pallas_src>
import functools

import jax
import jax.numpy as jnp
from jax.experimental import pallas as pl
from jax.experimental.pallas import tpu as pltpu


def _ema_kernel(m_ref, x_ref, avg_ref, out_ref):
    # m_ref: SMEM (1,) f32 scalar = momentum if initialised else 0.0
    # x_ref, avg_ref, out_ref: VMEM tiles (tile_rows, width) f32
    x = x_ref[...]
    out_ref[...] = x + m_ref[0] * (avg_ref[...] - x)


def _choose_layout(n):
    """Pick a lane-dense (rows, width) layout and a large row tile for n elements."""
    # Lane-dense last dim: as wide as possible (multiple of 128), capped at 4096.
    width = min(4096, max(128, ((n // 8) // 128) * 128))
    rows = -(-n // width)                       # ceil
    rows = max(8, ((rows + 7) // 8) * 8)        # sublane multiple of 8
    # ~2 MiB per buffer per block: 3 arrays x 2 pipeline bufs ~= 12 MiB of VMEM.
    max_tile_rows = max(8, (2 * 1024 * 1024) // (width * 4))
    if rows <= max_tile_rows:
        tile_rows = rows                        # single block for small buffers
    else:
        tile_rows = max_tile_rows
        rows = ((rows + tile_rows - 1) // tile_rows) * tile_rows  # pad rows
    return rows, width, tile_rows


@functools.partial(jax.jit, static_argnames=("momentum",))
def ema_update(x, average, initialised, *, momentum=0.995):
    """One training-mode update. Returns (new_average, new_initialised).

    x, average: arrays of identical shape (any rank); initialised: (1,) int32.
    """
    orig_shape = average.shape
    orig_dtype = average.dtype
    n = int(average.size)

    rows, width, tile_rows = _choose_layout(n)
    padded = rows * width

    x_f = x.astype(jnp.float32).reshape(-1)
    a_f = average.astype(jnp.float32).reshape(-1)
    if padded != n:
        x_f = jnp.pad(x_f, (0, padded - n))
        a_f = jnp.pad(a_f, (0, padded - n))
    x2d = x_f.reshape(rows, width)
    a2d = a_f.reshape(rows, width)

    # Fold the initialised flag into the scalar momentum: 0 -> copy x, m -> lerp.
    init_scalar = jnp.reshape(initialised, (-1,))[0] != 0
    m_eff = jnp.where(init_scalar, jnp.float32(momentum), jnp.float32(0.0))
    m_eff = m_eff.astype(jnp.float32).reshape(1)

    grid = (rows // tile_rows,)

    new2d = pl.pallas_call(
        _ema_kernel,
        out_shape=jax.ShapeDtypeStruct((rows, width), jnp.float32),
        grid_spec=pltpu.PrefetchScalarGridSpec(
            num_scalar_prefetch=0,
            grid=grid,
            in_specs=[
                pl.BlockSpec(memory_space=pltpu.SMEM),                 # m_eff scalar
                pl.BlockSpec((tile_rows, width), lambda i: (i, 0)),    # x tile
                pl.BlockSpec((tile_rows, width), lambda i: (i, 0)),    # average tile
            ],
            out_specs=pl.BlockSpec((tile_rows, width), lambda i: (i, 0)),
        ),
        input_output_aliases={2: 0},   # old average slab -> new average slab
        compiler_params=pltpu.CompilerParams(
            dimension_semantics=("parallel",),
        ),
    )(m_eff, x2d, a2d)

    new_avg = new2d.reshape(-1)[:n].reshape(orig_shape).astype(orig_dtype)
    new_init = jnp.ones_like(initialised)
    return new_avg, new_init


class ExponentialMovingAverage:
    """JAX/Pallas counterpart of the PyTorch module (functional buffer state)."""

    def __init__(self, *size: int, momentum: float = 0.995):
        self.average = jnp.ones(size, dtype=jnp.float32)     # torch.ones(*size)
        self.initialised = jnp.zeros((1,), dtype=jnp.int32)  # False
        self.momentum = momentum
        self.training = True

    def __call__(self, x):
        if self.training:
            self.update(x)
        return self.average

    def update(self, x):
        new_avg, new_init = ema_update(
            x, self.average, self.initialised, momentum=self.momentum
        )
        self.average = new_avg
        self.initialised = new_init


if __name__ == "__main__":
    key = jax.random.PRNGKey(0)
    k1, k2, k3, k4 = jax.random.split(key, 4)
    momentum = 0.995

    # --- Test 1: small 4-D buffer (single-block path) -------------------------
    shape = (2, 4, 16, 16)
    ema = ExponentialMovingAverage(*shape, momentum=momentum)
    x1 = jax.random.normal(k1, shape, dtype=jnp.float32)
    x2 = jax.random.normal(k2, shape, dtype=jnp.float32)

    out1 = jax.block_until_ready(ema(x1))   # first call: average <- x1
    out2 = jax.block_until_ready(ema(x2))   # second call: lerp path

    ref1 = x1
    ref2 = x2 + momentum * (ref1 - x2)
    assert out1.shape == shape and out2.shape == shape
    assert jnp.allclose(out1, ref1, atol=1e-6), "first update mismatch"
    assert jnp.allclose(out2, ref2, atol=1e-6), "second update mismatch"
    assert int(ema.initialised[0]) == 1

    # Eval mode: forward just returns the stored average (no kernel call).
    ema.training = False
    out3 = jax.block_until_ready(ema(x1))
    assert jnp.allclose(out3, out2, atol=1e-6)

    # --- Test 2: larger buffer exercising multi-block grid + row padding ------
    shape2 = (300, 4096)
    ema2 = ExponentialMovingAverage(*shape2, momentum=momentum)
    y1 = jax.random.normal(k3, shape2, dtype=jnp.float32)
    y2 = jax.random.normal(k4, shape2, dtype=jnp.float32)

    o1 = jax.block_until_ready(ema2(y1))
    o2 = jax.block_until_ready(ema2(y2))
    r1 = y1
    r2 = y2 + momentum * (r1 - y2)
    assert jnp.allclose(o1, r1, atol=1e-6), "large first update mismatch"
    assert jnp.allclose(o2, r2, atol=1e-5), "large second update mismatch"

    print("KERNEL_OK")
</pallas_src>

<mosaic_0001>
module attributes {stable_mosaic.version = 11 : i64} {
  func.func @_ema_kernel(%arg0: i32, %arg1: memref<1xf32, #tpu.memory_space<smem>>, %arg2: memref<8x256xf32, #tpu.memory_space<vmem>>, %arg3: memref<8x256xf32, #tpu.memory_space<vmem>>, %arg4: memref<8x256xf32, #tpu.memory_space<vmem>>) attributes {dimension_semantics = [#tpu.dimension_semantics<parallel>], iteration_bounds = array<i64: 1>, scalar_prefetch = 0 : i64, scratch_operands = 0 : i64, tpu.core_type = #tpu.core_type<tc>, window_params = [{transform_indices = @transform_0, window_bounds = array<i64: 1>}, {transform_indices = @transform_1, window_bounds = array<i64: 8, 256>}, {transform_indices = @transform_2, window_bounds = array<i64: 8, 256>}, {transform_indices = @transform_3, window_bounds = array<i64: 8, 256>}]} {
    %c0 = arith.constant 0 : index
    %c0_0 = arith.constant 0 : index
    %0 = vector.load %arg2[%c0, %c0_0] : memref<8x256xf32, #tpu.memory_space<vmem>>, vector<8x256xf32>
    %c0_1 = arith.constant 0 : index
    %1 = memref.load %arg1[%c0_1] : memref<1xf32, #tpu.memory_space<smem>>
    %c0_2 = arith.constant 0 : index
    %c0_3 = arith.constant 0 : index
    %2 = vector.load %arg3[%c0_2, %c0_3] : memref<8x256xf32, #tpu.memory_space<vmem>>, vector<8x256xf32>
    %3 = arith.subf %2, %0 : vector<8x256xf32>
    %4 = vector.broadcast %1 : f32 to vector<8x256xf32>
    %5 = arith.mulf %4, %3 : vector<8x256xf32>
    %6 = arith.addf %0, %5 : vector<8x256xf32>
    %c0_4 = arith.constant 0 : index
    %c0_5 = arith.constant 0 : index
    %7 = vector.load %arg4[%c0_4, %c0_5] : memref<8x256xf32, #tpu.memory_space<vmem>>, vector<8x256xf32>
    tpu.vector_store %arg4[%c0_4, %c0_5], %6 {strides = array<i32>} : memref<8x256xf32, #tpu.memory_space<vmem>>, vector<8x256xf32>,
    return
  }
  func.func @transform_0(%arg0: i32) -> i32 {
    %c0_i32 = arith.constant 0 : i32
    %c0_i32_0 = arith.constant 0 : i32
    return %c0_i32 : i32
  }
  func.func @transform_1(%arg0: i32) -> (i32, i32) {
    %c0_i32 = arith.constant 0 : i32
    %c0_i32_0 = arith.constant 0 : i32
    return %arg0, %c0_i32 : i32, i32
  }
  func.func @transform_2(%arg0: i32) -> (i32, i32) {
    %c0_i32 = arith.constant 0 : i32
    %c0_i32_0 = arith.constant 0 : i32
    return %arg0, %c0_i32 : i32, i32
  }
  func.func @transform_3(%arg0: i32) -> (i32, i32) {
    %c0_i32 = arith.constant 0 : i32
    %c0_i32_0 = arith.constant 0 : i32
    return %arg0, %c0_i32 : i32, i32
  }
}

</mosaic_0001>

<llo_original>
// kernel: ema_update.1
$region0: #{ema_update.1}
  #allocation0 [shape = 'u32[]', space=smem, size = 0x4, offset = 0x4, fixed_abs, tag = 'smem constant byte address 0x4 - core index']
  #allocation1 [shape = 'u32[72,128]{1,0:T(1,128)}', space=vmem, size = 0x9000, scoped, tag = 'internal scratch']
  #allocation2 [shape = 'f32[1]{0:T(128)S(6)}', space=smem, size = 0x200, scoped, tag = 'scoped memory for ema_update.1']
  %s0 = inlined_call_operand.<no memory space> [shape: f32[1], index: 0, kind: input, shape index: {}]
  %s1 = inlined_call_operand.vmem [shape: f32[8,256], index: 1, kind: input, shape index: {}]
  %s2 = inlined_call_operand.vmem [shape: f32[8,256], index: 2, kind: input, shape index: {}, may-alias: {2,3}]
  %s3 = inlined_call_operand.vmem [shape: f32[8,256], index: 3, kind: output, shape index: {}, may-alias: {2,3}]
  %s4 = sld [smem:[#allocation0]]
  $region22: #{ema_update.1} parent=0
    _
  %s6 = ssub.s32 1, %s4
  %s7 = scalar_select 0, %s6, %s4
  %8 = sst [smem:[#allocation2]] %s0
  // Predicated region
  $region2: #{ema_update.1} parent=0 // pred_check
    _
  $region3: #{ema_update.1} parent=0 // pred_check_branch
    %10 = sbr.rel (0) target = $region5
  $region4: #{ema_update.1} parent=0 // pred_region
    _
  $region5: #{ema_update.1} parent=0 // pred_fallthru
    _
  // Predicated region
  $region6: #{ema_update.1} parent=0 // pred_check
    _
  $region7: #{ema_update.1} parent=0 // pred_check_branch
    %12 = sbr.rel (0) target = $region9
  $region8: #{ema_update.1} parent=0 // pred_region
    _
  $region9: #{ema_update.1} parent=0 // pred_fallthru
    _
  // Predicated region
  $region10: #{ema_update.1} parent=0 // pred_check
    _
  $region11: #{ema_update.1} parent=0 // pred_check_branch
    %14 = sbr.rel (0) target = $region13
  $region12: #{ema_update.1} parent=0 // pred_region
    _
  $region13: #{ema_update.1} parent=0 // pred_fallthru
    _
  %v15 = vld [vmem:[%s1] sm:$0xff]
  %v16 = vld [vmem:[%s1 + $0x8] sm:$0xff]
  %s17 = sld [smem:[#allocation2]]
  %v18 = vld [vmem:[%s2] sm:$0xff]
  %v19 = vld [vmem:[%s2 + $0x8] sm:$0xff]
  %v20 = vsub.f32 %v18, %v15
  %v21 = vsub.f32 %v19, %v16
  %v22 = vstv %s17
  %v23 = vmul.f32 %v22, %v20
  %v24 = vmul.f32 %v22, %v21
  %v25 = vadd.f32 %v15, %v23
  %v26 = vadd.f32 %v16, %v24
  %27 = vst [vmem:[%s3] sm:$0xff] %v25
  %28 = vst [vmem:[%s3 + $0x8] sm:$0xff] %v26
  // Predicated region
  $region14: #{ema_update.1} parent=0 // pred_check
    _
  $region15: #{ema_update.1} parent=0 // pred_check_branch
    %30 = sbr.rel (0) target = $region17
  $region16: #{ema_update.1} parent=0 // pred_region
    _
  $region17: #{ema_update.1} parent=0 // pred_fallthru
    _
  // Predicated region
  $region18: #{ema_update.1} parent=0 // pred_check
    _
  $region19: #{ema_update.1} parent=0 // pred_check_branch
    %32 = sbr.rel (0) target = $region21
  $region20: #{ema_update.1} parent=0 // pred_region
    _
  $region21: #{ema_update.1} parent=0 // pred_fallthru
    _

</llo_original>
